<compile_context>
chip_gen: v5e
topology: v5e:2x2
jax: 0.10.0
libtpu: 0.0.40
codegen_flags: <defaults>
</compile_context>

<pallas_src>
import functools

import jax
import jax.numpy as jnp
from jax import lax
from jax.experimental import pallas as pl
from jax.experimental.pallas import tpu as pltpu


def _spatial_attention_kernel(x_ref, m_ref, o_ref, *, inv_c):
    """x_ref: [1, Nb, C, HW], m_ref: [2*HW, HW], o_ref: [1, Nb, HW]."""
    x = x_ref[0]                                        # [Nb, C, HW]
    avg = jnp.sum(x, axis=1) * inv_c                    # [Nb, HW] channel mean (sublane reduce)
    mx = jnp.max(x, axis=1)                             # [Nb, HW] channel max  (sublane reduce)
    feat = jnp.concatenate([avg, mx], axis=-1)          # [Nb, 2*HW] (128-aligned lane concat)
    sa = jnp.dot(feat, m_ref[...],
                 preferred_element_type=jnp.float32)    # [Nb, HW]: single MXU matmul, K = 2*HW
    # sigmoid(z) = 1 / (1 + exp(-z)); exp and the approximate reciprocal both run on
    # the EUP slot, keeping the VALU free.
    o_ref[0] = pl.reciprocal(1.0 + jnp.exp(-sa), approx=True).astype(o_ref.dtype)


def _conv_same_as_dense(w_oihw, H, W):
    """Lower a stride-1, SAME-zero-padded, bias-free 2D conv with Cout=1 to a dense
    [Cin*H*W, H*W] matrix acting on channel-flattened inputs.
    Pure weight preprocessing (input independent), done once in the wrapper."""
    cout, cin, kh, kw = w_oihw.shape
    assert cout == 1
    ph, pw = kh // 2, kw // 2
    yi = jnp.arange(H)[:, None, None, None]             # input row
    xi = jnp.arange(W)[None, :, None, None]             # input col
    yo = jnp.arange(H)[None, None, :, None]             # output row
    xo = jnp.arange(W)[None, None, None, :]             # output col
    ky = yi - yo + ph
    kx = xi - xo + pw
    valid = (ky >= 0) & (ky < kh) & (kx >= 0) & (kx < kw)        # [H, W, H, W]
    kyc = jnp.clip(ky, 0, kh - 1)
    kxc = jnp.clip(kx, 0, kw - 1)
    blocks = []
    for c in range(cin):
        tap = w_oihw[0, c][kyc, kxc]                             # [H, W, H, W]
        tap = jnp.where(valid, tap, 0.0)
        blocks.append(tap.reshape(H * W, H * W))                 # rows: input hw, cols: output hw
    return jnp.concatenate(blocks, axis=0).astype(jnp.float32)   # [Cin*H*W, H*W]


@jax.jit
def spatial_attention_pallas(x_nchw, w_oihw):
    """CBAM SpatialAttention forward: x [N, C, H, W] -> attention map [N, 1, H, W]."""
    N, C, H, W = x_nchw.shape
    HW = H * W

    m = _conv_same_as_dense(w_oihw, H, W)                # [2*HW, HW]

    # >= 2 parallel grid steps keep both v7x TensorCores busy; single-TC v5e/v6e run
    # them back to back (negligible per-step overhead), each step batch-folded into M.
    G = 2 if (N >= 2 and N % 2 == 0) else 1
    Nb = N // G
    x_blk = x_nchw.reshape(G, Nb, C, HW).astype(jnp.float32)   # free reshape of NCHW

    kernel = functools.partial(_spatial_attention_kernel, inv_c=1.0 / C)

    out = pl.pallas_call(
        kernel,
        out_shape=jax.ShapeDtypeStruct((G, Nb, HW), jnp.float32),
        grid=(G,),
        in_specs=[
            pl.BlockSpec((1, Nb, C, HW), lambda g: (g, 0, 0, 0)),
            pl.BlockSpec((2 * HW, HW), lambda g: (0, 0)),
        ],
        out_specs=pl.BlockSpec((1, Nb, HW), lambda g: (g, 0, 0)),
        compiler_params=pltpu.CompilerParams(dimension_semantics=("parallel",)),
    )(x_blk, m)

    return out.reshape(N, 1, H, W)                       # back to PyTorch NCHW layout


def reference_forward(x_nchw, w_oihw):
    """Pure-JAX transliteration of SpatialAttention.forward."""
    avg = jnp.mean(x_nchw, axis=1, keepdims=True)
    mx = jnp.max(x_nchw, axis=1, keepdims=True)
    z = jnp.concatenate([avg, mx], axis=1)               # [N, 2, H, W]
    y = lax.conv_general_dilated(
        z, w_oihw, window_strides=(1, 1), padding='SAME',
        dimension_numbers=('NCHW', 'OIHW', 'NCHW'),
        precision=lax.Precision.HIGHEST)                 # [N, 1, H, W]
    return jax.nn.sigmoid(y)


if __name__ == "__main__":
    # Small shapes consistent with the module: batch=4, channels=16, spatial 16x16.
    N, C, H, W = 4, 16, 16, 16

    key = jax.random.PRNGKey(0)
    kx, kw = jax.random.split(key)
    x = jax.random.normal(kx, (N, C, H, W), jnp.float32)
    # Conv2d(2, 1, 7, padding=3, bias=False) weight, PyTorch OIHW layout.
    w = jax.random.normal(kw, (1, 2, 7, 7), jnp.float32) / jnp.sqrt(7.0 * 7.0 * 2.0)

    out = jax.block_until_ready(spatial_attention_pallas(x, w))
    ref = reference_forward(x, w)

    assert out.shape == (N, 1, H, W), out.shape
    max_err = float(jnp.max(jnp.abs(out - ref)))
    assert max_err < 1e-2, f"mismatch vs reference: {max_err}"

    print("KERNEL_OK")
</pallas_src>

<mosaic_0001>
module attributes {stable_mosaic.version = 11 : i64} {
  func.func @_spatial_attention_kernel(%arg0: i32, %arg1: memref<1x2x16x256xf32, #tpu.memory_space<vmem>>, %arg2: memref<512x256xf32, #tpu.memory_space<vmem>>, %arg3: memref<1x2x256xf32, #tpu.memory_space<vmem>>) attributes {dimension_semantics = [#tpu.dimension_semantics<parallel>], iteration_bounds = array<i64: 2>, scalar_prefetch = 0 : i64, scratch_operands = 0 : i64, tpu.core_type = #tpu.core_type<tc>, window_params = [{transform_indices = @transform_0, window_bounds = array<i64: 1, 2, 16, 256>}, {pipeline_mode = #tpu.pipeline_mode<synchronous>, transform_indices = @transform_1, window_bounds = array<i64: 512, 256>}, {transform_indices = @transform_2, window_bounds = array<i64: 1, 2, 256>}]} {
    %c0 = arith.constant 0 : index
    %c0_0 = arith.constant 0 : index
    %c0_1 = arith.constant 0 : index
    %c0_2 = arith.constant 0 : index
    %0 = vector.load %arg1[%c0, %c0_0, %c0_1, %c0_2] : memref<1x2x16x256xf32, #tpu.memory_space<vmem>>, vector<1x2x16x256xf32>
    %1 = vector.shape_cast %0 : vector<1x2x16x256xf32> to vector<2x16x256xf32>
    %cst = arith.constant dense<0.000000e+00> : vector<2x256xf32>
    %2 = vector.multi_reduction <add>, %1, %cst [1] : vector<2x16x256xf32> to vector<2x256xf32>
    %cst_3 = arith.constant 6.250000e-02 : f32
    %3 = vector.broadcast %cst_3 : f32 to vector<2x256xf32>
    %4 = arith.mulf %2, %3 : vector<2x256xf32>
    %cst_4 = arith.constant dense<0xFF800000> : vector<2x256xf32>
    %5 = vector.multi_reduction <maximumf>, %1, %cst_4 [1] : vector<2x16x256xf32> to vector<2x256xf32>
    %6 = tpu.concatenate %4, %5 in 1 : vector<2x256xf32>, vector<2x256xf32> -> vector<2x512xf32>
    %c0_5 = arith.constant 0 : index
    %c0_6 = arith.constant 0 : index
    %7 = vector.load %arg2[%c0_5, %c0_6] : memref<512x256xf32, #tpu.memory_space<vmem>>, vector<512x256xf32>
    %cst_7 = arith.constant dense<0.000000e+00> : vector<2x256xf32>
    %8 = tpu.matmul %6, %7, %cst_7 {dimension_numbers = #tpu.dot_dimension_numbers<[1], [0], [0], [1], [0, 0, 1, 1], [], []>} : vector<2x512xf32>, vector<512x256xf32>, vector<2x256xf32> -> vector<2x256xf32>
    %cst_8 = arith.constant 0.000000e+00 : f32
    %9 = vector.broadcast %cst_8 : f32 to vector<2x256xf32>
    %10 = arith.subf %9, %8 : vector<2x256xf32>
    %11 = math.exp %10 : vector<2x256xf32>
    %cst_9 = arith.constant 1.000000e+00 : f32
    %12 = vector.broadcast %cst_9 : f32 to vector<2x256xf32>
    %13 = arith.addf %12, %11 : vector<2x256xf32>
    %14 = tpu.reciprocal %13 {approx = true} : vector<2x256xf32> -> vector<2x256xf32>
    %c0_10 = arith.constant 0 : index
    %c0_11 = arith.constant 0 : index
    %c0_12 = arith.constant 0 : index
    %15 = vector.load %arg3[%c0_10, %c0_11, %c0_12] : memref<1x2x256xf32, #tpu.memory_space<vmem>>, vector<1x2x256xf32>
    %16 = vector.shape_cast %15 : vector<1x2x256xf32> to vector<2x256xf32>
    %17 = vector.shape_cast %14 : vector<2x256xf32> to vector<1x2x256xf32>
    tpu.vector_store %arg3[%c0_10, %c0_11, %c0_12], %17 {strides = array<i32>} : memref<1x2x256xf32, #tpu.memory_space<vmem>>, vector<1x2x256xf32>,
    return
  }
  func.func @transform_0(%arg0: i32) -> (i32, i32, i32, i32) {
    %c0_i32 = arith.constant 0 : i32
    %c0_i32_0 = arith.constant 0 : i32
    %c0_i32_1 = arith.constant 0 : i32
    %c0_i32_2 = arith.constant 0 : i32
    return %arg0, %c0_i32, %c0_i32_0, %c0_i32_1 : i32, i32, i32, i32
  }
  func.func @transform_1(%arg0: i32) -> (i32, i32) {
    %c0_i32 = arith.constant 0 : i32
    %c0_i32_0 = arith.constant 0 : i32
    %c0_i32_1 = arith.constant 0 : i32
    return %c0_i32, %c0_i32_0 : i32, i32
  }
  func.func @transform_2(%arg0: i32) -> (i32, i32, i32) {
    %c0_i32 = arith.constant 0 : i32
    %c0_i32_0 = arith.constant 0 : i32
    %c0_i32_1 = arith.constant 0 : i32
    return %arg0, %c0_i32, %c0_i32_0 : i32, i32, i32
  }
}

</mosaic_0001>

<llo_original>
// kernel: spatial_attention_pallas.1
$region0: #{spatial_attention_pallas.1}
  #allocation0 [shape = 'u32[]', space=smem, size = 0x4, offset = 0x4, fixed_abs, tag = 'smem constant byte address 0x4 - core index']
  #allocation1 [shape = 'u32[72,128]{1,0:T(1,128)}', space=vmem, size = 0x9000, scoped, tag = 'internal scratch']
  %s0 = inlined_call_operand.vmem [shape: f32[2,2,16,256], index: 0, kind: input, shape index: {}]
  %s1 = inlined_call_operand.vmem [shape: f32[512,256], index: 1, kind: input, shape index: {}]
  %s2 = inlined_call_operand.vmem [shape: f32[2,2,256], index: 2, kind: output, shape index: {}]
  %s3 = sld [smem:[#allocation0]]
  $region41: #{spatial_attention_pallas.1} parent=0
    _
  %s5 = ssub.s32 1, %s3
  %s6 = scalar_select 0, %s5, %s3
  loop: start=0, step=1, limit=4
  $region2: #{spatial_attention_pallas.1} parent=0 // loop_pre_header
    _
  $region3: #{spatial_attention_pallas.1} parent=0 // loop_header
    %s8 = sphi 0, %s12
    %p9 = scmp.ge.s32.totalorder %s8, 4
    %s18 = sphi 0, %s20
    %s21 = sphi 0, %s18
    %s22 = sphi 0, %s21
    %s38 = sphi 0, %s22
    %s42 = sphi 0, %s42
    %s44 = sphi 0, %s42
    %s45 = sphi 0, %s44
    %s59 = sphi 0, %s45
    %s65 = sphi 0, %s67
    %s68 = sphi 0, %s65
    %s69 = sphi 0, %s68
    %s85 = sphi 0, %s69
  $region4: #{spatial_attention_pallas.1} parent=0 // loop_header_branch
    %11 = sbr.rel (%p9) target = $region8
  $region5: #{spatial_attention_pallas.1} parent=0 // loop_body
    %s13 = ssub.s32 %s8, 1
    %s14 = ssub.s32 %s8, 2
    %s15 = sadd.s32 %s8, 1
    %s16 = ssub.s32 %s8, %s15
    %p17 = scmp.eq.s32.totalorder %s16, 0
    %s19 = sadd.s32 %s18, 1
    %s20 = scalar_select %p17, %s18, %s19
    %p23 = pneg %p17
    %p24 = scmp.eq.s32.totalorder %s8, 1
    %p25 = por %p23, %p24
    %p26 = scmp.ne.s32.totalorder %s18, %s21
    %p27 = scmp.eq.s32.totalorder %s8, 0
    %p28 = por %p26, %p27
    %p29 = scmp.ne.s32.totalorder %s18, %s21
    %p30 = scmp.eq.s32.totalorder %s13, 1
    %p31 = por %p29, %p30
    %p32 = scmp.ne.s32.totalorder %s21, %s22
    %p33 = scmp.eq.s32.totalorder %s13, 0
    %p34 = por %p32, %p33
    %p35 = scmp.ne.s32.totalorder %s21, %s22
    %p36 = scmp.eq.s32.totalorder %s14, 1
    %p37 = por %p35, %p36
    %p39 = scmp.ne.s32.totalorder %s22, %s38
    %p40 = scmp.eq.s32.totalorder %s14, 0
    %p41 = por %p39, %p40
    %s43 = sadd.s32 %s42, 1
    %p46 = scmp.eq.s32.totalorder %s8, 1
    %p47 = scmp.ne.s32.totalorder %s42, %s44
    %p48 = scmp.eq.s32.totalorder %s8, 0
    %p49 = por %p47, %p48
    %p50 = scmp.ne.s32.totalorder %s42, %s44
    %p51 = scmp.eq.s32.totalorder %s13, 1
    %p52 = por %p50, %p51
    %p53 = scmp.ne.s32.totalorder %s44, %s45
    %p54 = scmp.eq.s32.totalorder %s13, 0
    %p55 = por %p53, %p54
    %p56 = scmp.ne.s32.totalorder %s44, %s45
    %p57 = scmp.eq.s32.totalorder %s14, 1
    %p58 = por %p56, %p57
    %p60 = scmp.ne.s32.totalorder %s45, %s59
    %p61 = scmp.eq.s32.totalorder %s14, 0
    %p62 = por %p60, %p61
    %s63 = ssub.s32 %s8, %s15
    %p64 = scmp.eq.s32.totalorder %s63, 0
    %s66 = sadd.s32 %s65, 1
    %s67 = scalar_select %p64, %s65, %s66
    %p70 = pneg %p64
    %p71 = scmp.eq.s32.totalorder %s8, 1
    %p72 = por %p70, %p71
    %p73 = scmp.ne.s32.totalorder %s65, %s68
    %p74 = scmp.eq.s32.totalorder %s8, 0
    %p75 = por %p73, %p74
    %p76 = scmp.ne.s32.totalorder %s65, %s68
    %p77 = scmp.eq.s32.totalorder %s13, 1
    %p78 = por %p76, %p77
    %p79 = scmp.ne.s32.totalorder %s68, %s69
    %p80 = scmp.eq.s32.totalorder %s13, 0
    %p81 = por %p79, %p80
    %p82 = scmp.ne.s32.totalorder %s68, %s69
    %p83 = scmp.eq.s32.totalorder %s14, 1
    %p84 = por %p82, %p83
    %p86 = scmp.ne.s32.totalorder %s69, %s85
    %p87 = scmp.eq.s32.totalorder %s14, 0
    %p88 = por %p86, %p87
    %p89 = scmp.le.s32.totalorder 1, %s8
    %p90 = scmp.lt.s32.totalorder %s8, 3
    %p91 = pnand %p89, %p90
    %p92 = pneg %p91
    // Predicated region
    $region9: #{spatial_attention_pallas.1} parent=5 // pred_check
      _
    $region10: #{spatial_attention_pallas.1} parent=5 // pred_check_branch
      %94 = sbr.rel (%p91) target = $region12
    $region11: #{spatial_attention_pallas.1} parent=5 // pred_region
      %s95 = ssub.s32 %s8, 1
      // Predicated region
      $region13: #{spatial_attention_pallas.1} parent=11 // pred_check
        %p96 = pneg %p55
      $region14: #{spatial_attention_pallas.1} parent=11 // pred_check_branch
        %98 = sbr.rel (%p96) target = $region16
      $region15: #{spatial_attention_pallas.1} parent=11 // pred_region
        _
      $region16: #{spatial_attention_pallas.1} parent=11 // pred_fallthru
        _
    $region12: #{spatial_attention_pallas.1} parent=5 // pred_fallthru
      _
    %p99 = scmp.lt.s32.totalorder %s8, 2
    // Predicated region
    $region17: #{spatial_attention_pallas.1} parent=5 // pred_check
      %p100 = pneg %p99
    $region18: #{spatial_attention_pallas.1} parent=5 // pred_check_branch
      %102 = sbr.rel (%p100) target = $region20
    $region19: #{spatial_attention_pallas.1} parent=5 // pred_region
      // Predicated region
      $region21: #{spatial_attention_pallas.1} parent=19 // pred_check
        %p103 = pneg %p28
      $region22: #{spatial_attention_pallas.1} parent=19 // pred_check_branch
        %105 = sbr.rel (%p103) target = $region24
      $region23: #{spatial_attention_pallas.1} parent=19 // pred_region
        %p106 = scmp.lt.s32.totalorder %s8, 1
        %s107 = scalar_select %p106, %s8, 1
        %s108 = smul.addr %s107, 8
        %s109 = smul.addr %s108, 8
        %s110 = scalar_lea.vmem %s0, %s109
      $region24: #{spatial_attention_pallas.1} parent=19 // pred_fallthru
        _
    $region20: #{spatial_attention_pallas.1} parent=5 // pred_fallthru
      _
    %p111 = scmp.le.s32.totalorder 1, %s8
    %p112 = scmp.lt.s32.totalorder %s8, 3
    %p113 = pnand %p111, %p112
    %p114 = pneg %p113
    // Predicated region
    $region25: #{spatial_attention_pallas.1} parent=5 // pred_check
      _
    $region26: #{spatial_attention_pallas.1} parent=5 // pred_check_branch
      %116 = sbr.rel (%p113) target = $region28
    $region27: #{spatial_attention_pallas.1} parent=5 // pred_region
      %s117 = ssub.s32 %s8, 1
      %p118 = scmp.lt.s32.totalorder %s13, 1
      %s119 = scalar_select %p118, %s13, 1
      %s120 = smul.addr %s119, 8
      %s121 = smul.addr %s120, 8
      %s122 = scalar_lea.vmem %s0, %s121
      %p123 = pneg %p34
      %p124 = pneg %p31
      %p125 = pneg %p55
      %p126 = pneg %p52
      %p127 = pneg %p81
      %p128 = pneg %p78
      %p129 = scmp.lt.s32.totalorder %s13, 1
      %s130 = scalar_select %p129, %s13, 1
      %s131 = smul.addr %s130, 2
      %s132 = smul.addr %s131, 2
      %s133 = scalar_lea.vmem %s2, %s132
      %p134 = scmp.lt.s32.totalorder %s13, 1
      %s135 = scalar_select %p134, %s13, 1
      %s136 = smul.addr %s135, 8
      %s137 = smul.addr %s136, 8
      %s138 = scalar_lea.vmem %s0, %s137
      %p139 = scmp.lt.s32.totalorder %s13, 1
      %s140 = scalar_select %p139, %s13, 1
      %s141 = smul.addr %s140, 2
      %s142 = smul.addr %s141, 2
      %s143 = scalar_lea.vmem %s2, %s142
      %v144 = vld [vmem:[%s138] sm:$0xff]
      %v145 = vld [vmem:[%s138 + $0x8] sm:$0xff]
      %v146 = vld [vmem:[%s138 + $0x10] sm:$0xff]
      %v147 = vld [vmem:[%s138 + $0x18] sm:$0xff]
      %v148 = vld [vmem:[%s138 + $0x20] sm:$0xff]
      %v149 = vld [vmem:[%s138 + $0x28] sm:$0xff]
      %v150 = vld [vmem:[%s138 + $0x30] sm:$0xff]
      %v151 = vld [vmem:[%s138 + $0x38] sm:$0xff]
      %v152 = vadd.f32 %v144, %v146
      %v153 = vrot.slane %v152, 4
      %v154 = vadd.f32 %v152, %v153
      %v155 = vrot.slane %v154, 2
      %v156 = vadd.f32 %v154, %v155
      %v157 = vrot.slane %v156, 1
      %v158 = vadd.f32 %v156, %v157
      %v159 = vadd.f32 %v145, %v147
      %v160 = vrot.slane %v159, 4
      %v161 = vadd.f32 %v159, %v160
      %v162 = vrot.slane %v161, 2
      %v163 = vadd.f32 %v161, %v162
      %v164 = vrot.slane %v163, 1
      %v165 = vadd.f32 %v163, %v164
      %v166 = vadd.f32 %v148, %v150
      %v167 = vrot.slane %v166, 4
      %v168 = vadd.f32 %v166, %v167
      %v169 = vrot.slane %v168, 2
      %v170 = vadd.f32 %v168, %v169
      %v171 = vrot.slane %v170, 1
      %v172 = vadd.f32 %v170, %v171
      %v173 = vadd.f32 %v149, %v151
      %v174 = vrot.slane %v173, 4
      %v175 = vadd.f32 %v173, %v174
      %v176 = vrot.slane %v175, 2
      %v177 = vadd.f32 %v175, %v176
      %v178 = vrot.slane %v177, 1
      %v179 = vadd.f32 %v177, %v178
      %v180 = vmul.f32 %v158, 0.0625
      %v181 = vmul.f32 %v165, 0.0625
      %v182 = vmul.f32 %v172, 0.0625
      %v183 = vmul.f32 %v179, 0.0625
      %v184 = vmax.f32 %v144, %v146
      %v185 = vrot.slane %v184, 4
      %v186 = vmax.f32 %v184, %v185
      %v187 = vrot.slane %v186, 2
      %v188 = vmax.f32 %v186, %v187
      %v189 = vrot.slane %v188, 1
      %v190 = vmax.f32 %v188, %v189
      %v191 = vmax.f32 %v145, %v147
      %v192 = vrot.slane %v191, 4
      %v193 = vmax.f32 %v191, %v192
      %v194 = vrot.slane %v193, 2
      %v195 = vmax.f32 %v193, %v194
      %v196 = vrot.slane %v195, 1
      %v197 = vmax.f32 %v195, %v196
      %v198 = vmax.f32 %v148, %v150
      %v199 = vrot.slane %v198, 4
      %v200 = vmax.f32 %v198, %v199
      %v201 = vrot.slane %v200, 2
      %v202 = vmax.f32 %v200, %v201
      %v203 = vrot.slane %v202, 1
      %v204 = vmax.f32 %v202, %v203
      %v205 = vmax.f32 %v149, %v151
      %v206 = vrot.slane %v205, 4
      %v207 = vmax.f32 %v205, %v206
      %v208 = vrot.slane %v207, 2
      %v209 = vmax.f32 %v207, %v208
      %v210 = vrot.slane %v209, 1
      %v211 = vmax.f32 %v209, %v210
      %vm216 = vcmask 1041409
      %v217 = vsel %vm216, %v182, %v180
      %v218 = vsel %vm216, %v183, %v181
      %v225 = vsel %vm216, %v204, %v190
      %v226 = vsel %vm216, %v211, %v197
      %v229 = vld [vmem:[%s1] sm:$0xff]
      %v230 = vld [vmem:[%s1 + $0x8] sm:$0xff]
      %v231 = vld [vmem:[%s1 + $0x10] sm:$0xff]
      %v232 = vld [vmem:[%s1 + $0x18] sm:$0xff]
      %v233 = vld [vmem:[%s1 + $0x20] sm:$0xff]
      %v234 = vld [vmem:[%s1 + $0x28] sm:$0xff]
      %v235 = vld [vmem:[%s1 + $0x30] sm:$0xff]
      %v236 = vld [vmem:[%s1 + $0x38] sm:$0xff]
      %v237 = vld [vmem:[%s1 + $0x40] sm:$0xff]
      %v238 = vld [vmem:[%s1 + $0x48] sm:$0xff]
      %v239 = vld [vmem:[%s1 + $0x50] sm:$0xff]
      %v240 = vld [vmem:[%s1 + $0x58] sm:$0xff]
      %v241 = vld [vmem:[%s1 + $0x60] sm:$0xff]
      %v242 = vld [vmem:[%s1 + $0x68] sm:$0xff]
      %v243 = vld [vmem:[%s1 + $0x70] sm:$0xff]
      %v244 = vld [vmem:[%s1 + $0x78] sm:$0xff]
      %v245 = vld [vmem:[%s1 + $0x80] sm:$0xff]
      %v246 = vld [vmem:[%s1 + $0x88] sm:$0xff]
      %v247 = vld [vmem:[%s1 + $0x90] sm:$0xff]
      %v248 = vld [vmem:[%s1 + $0x98] sm:$0xff]
      %v249 = vld [vmem:[%s1 + $0xa0] sm:$0xff]
      %v250 = vld [vmem:[%s1 + $0xa8] sm:$0xff]
      %v251 = vld [vmem:[%s1 + $0xb0] sm:$0xff]
      %v252 = vld [vmem:[%s1 + $0xb8] sm:$0xff]
      %v253 = vld [vmem:[%s1 + $0xc0] sm:$0xff]
      %v254 = vld [vmem:[%s1 + $0xc8] sm:$0xff]
      %v255 = vld [vmem:[%s1 + $0xd0] sm:$0xff]
      %v256 = vld [vmem:[%s1 + $0xd8] sm:$0xff]
      %v257 = vld [vmem:[%s1 + $0xe0] sm:$0xff]
      %v258 = vld [vmem:[%s1 + $0xe8] sm:$0xff]
      %v259 = vld [vmem:[%s1 + $0xf0] sm:$0xff]
      %v260 = vld [vmem:[%s1 + $0xf8] sm:$0xff]
      %v261 = vld [vmem:[%s1 + $0x100] sm:$0xff]
      %v262 = vld [vmem:[%s1 + $0x108] sm:$0xff]
      %v263 = vld [vmem:[%s1 + $0x110] sm:$0xff]
      %v264 = vld [vmem:[%s1 + $0x118] sm:$0xff]
      %v265 = vld [vmem:[%s1 + $0x120] sm:$0xff]
      %v266 = vld [vmem:[%s1 + $0x128] sm:$0xff]
      %v267 = vld [vmem:[%s1 + $0x130] sm:$0xff]
      %v268 = vld [vmem:[%s1 + $0x138] sm:$0xff]
      %v269 = vld [vmem:[%s1 + $0x140] sm:$0xff]
      %v270 = vld [vmem:[%s1 + $0x148] sm:$0xff]
      %v271 = vld [vmem:[%s1 + $0x150] sm:$0xff]
      %v272 = vld [vmem:[%s1 + $0x158] sm:$0xff]
      %v273 = vld [vmem:[%s1 + $0x160] sm:$0xff]
      %v274 = vld [vmem:[%s1 + $0x168] sm:$0xff]
      %v275 = vld [vmem:[%s1 + $0x170] sm:$0xff]
      %v276 = vld [vmem:[%s1 + $0x178] sm:$0xff]
      %v277 = vld [vmem:[%s1 + $0x180] sm:$0xff]
      %v278 = vld [vmem:[%s1 + $0x188] sm:$0xff]
      %v279 = vld [vmem:[%s1 + $0x190] sm:$0xff]
      %v280 = vld [vmem:[%s1 + $0x198] sm:$0xff]
      %v281 = vld [vmem:[%s1 + $0x1a0] sm:$0xff]
      %v282 = vld [vmem:[%s1 + $0x1a8] sm:$0xff]
      %v283 = vld [vmem:[%s1 + $0x1b0] sm:$0xff]
      %v284 = vld [vmem:[%s1 + $0x1b8] sm:$0xff]
      %v285 = vld [vmem:[%s1 + $0x1c0] sm:$0xff]
      %v286 = vld [vmem:[%s1 + $0x1c8] sm:$0xff]
      %v287 = vld [vmem:[%s1 + $0x1d0] sm:$0xff]
      %v288 = vld [vmem:[%s1 + $0x1d8] sm:$0xff]
      %v289 = vld [vmem:[%s1 + $0x1e0] sm:$0xff]
      %v290 = vld [vmem:[%s1 + $0x1e8] sm:$0xff]
      %v291 = vld [vmem:[%s1 + $0x1f0] sm:$0xff]
      %v292 = vld [vmem:[%s1 + $0x1f8] sm:$0xff]
      %v293 = vld [vmem:[%s1 + $0x200] sm:$0xff]
      %v294 = vld [vmem:[%s1 + $0x208] sm:$0xff]
      %v295 = vld [vmem:[%s1 + $0x210] sm:$0xff]
      %v296 = vld [vmem:[%s1 + $0x218] sm:$0xff]
      %v297 = vld [vmem:[%s1 + $0x220] sm:$0xff]
      %v298 = vld [vmem:[%s1 + $0x228] sm:$0xff]
      %v299 = vld [vmem:[%s1 + $0x230] sm:$0xff]
      %v300 = vld [vmem:[%s1 + $0x238] sm:$0xff]
      %v301 = vld [vmem:[%s1 + $0x240] sm:$0xff]
      %v302 = vld [vmem:[%s1 + $0x248] sm:$0xff]
      %v303 = vld [vmem:[%s1 + $0x250] sm:$0xff]
      %v304 = vld [vmem:[%s1 + $0x258] sm:$0xff]
      %v305 = vld [vmem:[%s1 + $0x260] sm:$0xff]
      %v306 = vld [vmem:[%s1 + $0x268] sm:$0xff]
      %v307 = vld [vmem:[%s1 + $0x270] sm:$0xff]
      %v308 = vld [vmem:[%s1 + $0x278] sm:$0xff]
      %v309 = vld [vmem:[%s1 + $0x280] sm:$0xff]
      %v310 = vld [vmem:[%s1 + $0x288] sm:$0xff]
      %v311 = vld [vmem:[%s1 + $0x290] sm:$0xff]
      %v312 = vld [vmem:[%s1 + $0x298] sm:$0xff]
      %v313 = vld [vmem:[%s1 + $0x2a0] sm:$0xff]
      %v314 = vld [vmem:[%s1 + $0x2a8] sm:$0xff]
      %v315 = vld [vmem:[%s1 + $0x2b0] sm:$0xff]
      %v316 = vld [vmem:[%s1 + $0x2b8] sm:$0xff]
      %v317 = vld [vmem:[%s1 + $0x2c0] sm:$0xff]
      %v318 = vld [vmem:[%s1 + $0x2c8] sm:$0xff]
      %v319 = vld [vmem:[%s1 + $0x2d0] sm:$0xff]
      %v320 = vld [vmem:[%s1 + $0x2d8] sm:$0xff]
      %v321 = vld [vmem:[%s1 + $0x2e0] sm:$0xff]
      %v322 = vld [vmem:[%s1 + $0x2e8] sm:$0xff]
      %v323 = vld [vmem:[%s1 + $0x2f0] sm:$0xff]
      %v324 = vld [vmem:[%s1 + $0x2f8] sm:$0xff]
      %v325 = vld [vmem:[%s1 + $0x300] sm:$0xff]
      %v326 = vld [vmem:[%s1 + $0x308] sm:$0xff]
      %v327 = vld [vmem:[%s1 + $0x310] sm:$0xff]
      %v328 = vld [vmem:[%s1 + $0x318] sm:$0xff]
      %v329 = vld [vmem:[%s1 + $0x320] sm:$0xff]
      %v330 = vld [vmem:[%s1 + $0x328] sm:$0xff]
      %v331 = vld [vmem:[%s1 + $0x330] sm:$0xff]
      %v332 = vld [vmem:[%s1 + $0x338] sm:$0xff]
      %v333 = vld [vmem:[%s1 + $0x340] sm:$0xff]
      %v334 = vld [vmem:[%s1 + $0x348] sm:$0xff]
      %v335 = vld [vmem:[%s1 + $0x350] sm:$0xff]
      %v336 = vld [vmem:[%s1 + $0x358] sm:$0xff]
      %v337 = vld [vmem:[%s1 + $0x360] sm:$0xff]
      %v338 = vld [vmem:[%s1 + $0x368] sm:$0xff]
      %v339 = vld [vmem:[%s1 + $0x370] sm:$0xff]
      %v340 = vld [vmem:[%s1 + $0x378] sm:$0xff]
      %v341 = vld [vmem:[%s1 + $0x380] sm:$0xff]
      %v342 = vld [vmem:[%s1 + $0x388] sm:$0xff]
      %v343 = vld [vmem:[%s1 + $0x390] sm:$0xff]
      %v344 = vld [vmem:[%s1 + $0x398] sm:$0xff]
      %v345 = vld [vmem:[%s1 + $0x3a0] sm:$0xff]
      %v346 = vld [vmem:[%s1 + $0x3a8] sm:$0xff]
      %v347 = vld [vmem:[%s1 + $0x3b0] sm:$0xff]
      %v348 = vld [vmem:[%s1 + $0x3b8] sm:$0xff]
      %v349 = vld [vmem:[%s1 + $0x3c0] sm:$0xff]
      %v350 = vld [vmem:[%s1 + $0x3c8] sm:$0xff]
      %v351 = vld [vmem:[%s1 + $0x3d0] sm:$0xff]
      %v352 = vld [vmem:[%s1 + $0x3d8] sm:$0xff]
      %v353 = vld [vmem:[%s1 + $0x3e0] sm:$0xff]
      %v354 = vld [vmem:[%s1 + $0x3e8] sm:$0xff]
      %v355 = vld [vmem:[%s1 + $0x3f0] sm:$0xff]
      %v356 = vld [vmem:[%s1 + $0x3f8] sm:$0xff]
      %357 = vmatpush.msra.mxu0 %v259
      %358 = vmatpush.msra.mxu0 %v257
      %359 = vmatpush.msra.mxu0 %v255
      %360 = vmatpush.msra.mxu0 %v253
      %361 = vmatpush.msra.mxu0 %v251
      %362 = vmatpush.msra.mxu0 %v249
      %363 = vmatpush.msra.mxu0 %v247
      %364 = vmatpush.msra.mxu0 %v245
      %365 = vmatpush.msra.mxu0 %v243
      %366 = vmatpush.msra.mxu0 %v241
      %367 = vmatpush.msra.mxu0 %v239
      %368 = vmatpush.msra.mxu0 %v237
      %369 = vmatpush.msra.mxu0 %v235
      %370 = vmatpush.msra.mxu0 %v233
      %371 = vmatpush.msra.mxu0 %v231
      %372 = vmatpush.msra.mxu0 %v229
      %373 = vmatmul.f32.gmra.mxu0 %v217
      %v374 = vpop.f32.mrf.mxu0
      %v375 = vadd.f32 0.0, %v374
      %376 = vdwg.mxu0
      %377 = vmatpush.msra.mxu0 %v291
      %378 = vmatpush.msra.mxu0 %v289
      %379 = vmatpush.msra.mxu0 %v287
      %380 = vmatpush.msra.mxu0 %v285
      %381 = vmatpush.msra.mxu0 %v283
      %382 = vmatpush.msra.mxu0 %v281
      %383 = vmatpush.msra.mxu0 %v279
      %384 = vmatpush.msra.mxu0 %v277
      %385 = vmatpush.msra.mxu0 %v275
      %386 = vmatpush.msra.mxu0 %v273
      %387 = vmatpush.msra.mxu0 %v271
      %388 = vmatpush.msra.mxu0 %v269
      %389 = vmatpush.msra.mxu0 %v267
      %390 = vmatpush.msra.mxu0 %v265
      %391 = vmatpush.msra.mxu0 %v263
      %392 = vmatpush.msra.mxu0 %v261
      %393 = vmatmul.f32.gmra.mxu0 %v218
      %v394 = vpop.f32.mrf.mxu0
      %v395 = vadd.f32 %v375, %v394
      %396 = vdwg.mxu0
      %397 = vmatpush.msra.mxu0 %v323
      %398 = vmatpush.msra.mxu0 %v321
      %399 = vmatpush.msra.mxu0 %v319
      %400 = vmatpush.msra.mxu0 %v317
      %401 = vmatpush.msra.mxu0 %v315
      %402 = vmatpush.msra.mxu0 %v313
      %403 = vmatpush.msra.mxu0 %v311
      %404 = vmatpush.msra.mxu0 %v309
      %405 = vmatpush.msra.mxu0 %v307
      %406 = vmatpush.msra.mxu0 %v305
      %407 = vmatpush.msra.mxu0 %v303
      %408 = vmatpush.msra.mxu0 %v301
      %409 = vmatpush.msra.mxu0 %v299
      %410 = vmatpush.msra.mxu0 %v297
      %411 = vmatpush.msra.mxu0 %v295
      %412 = vmatpush.msra.mxu0 %v293
      %413 = vmatmul.f32.gmra.mxu0 %v225
      %v414 = vpop.f32.mrf.mxu0
      %v415 = vadd.f32 %v395, %v414
      %416 = vdwg.mxu0
      %417 = vmatpush.msra.mxu0 %v355
      %418 = vmatpush.msra.mxu0 %v353
      %419 = vmatpush.msra.mxu0 %v351
      %420 = vmatpush.msra.mxu0 %v349
      %421 = vmatpush.msra.mxu0 %v347
      %422 = vmatpush.msra.mxu0 %v345
      %423 = vmatpush.msra.mxu0 %v343
      %424 = vmatpush.msra.mxu0 %v341
      %425 = vmatpush.msra.mxu0 %v339
      %426 = vmatpush.msra.mxu0 %v337
      %427 = vmatpush.msra.mxu0 %v335
      %428 = vmatpush.msra.mxu0 %v333
      %429 = vmatpush.msra.mxu0 %v331
      %430 = vmatpush.msra.mxu0 %v329
      %431 = vmatpush.msra.mxu0 %v327
      %432 = vmatpush.msra.mxu0 %v325
      %433 = vmatmul.f32.gmra.mxu0 %v226
      %v434 = vpop.f32.mrf.mxu0
      %v435 = vadd.f32 %v415, %v434
      %436 = vdwg.mxu0
      %437 = vmatpush.msra.mxu0 %v260
      %438 = vmatpush.msra.mxu0 %v258
      %439 = vmatpush.msra.mxu0 %v256
      %440 = vmatpush.msra.mxu0 %v254
      %441 = vmatpush.msra.mxu0 %v252
      %442 = vmatpush.msra.mxu0 %v250
      %443 = vmatpush.msra.mxu0 %v248
      %444 = vmatpush.msra.mxu0 %v246
      %445 = vmatpush.msra.mxu0 %v244
      %446 = vmatpush.msra.mxu0 %v242
      %447 = vmatpush.msra.mxu0 %v240
      %448 = vmatpush.msra.mxu0 %v238
      %449 = vmatpush.msra.mxu0 %v236
      %450 = vmatpush.msra.mxu0 %v234
      %451 = vmatpush.msra.mxu0 %v232
      %452 = vmatpush.msra.mxu0 %v230
      %453 = vmatmul.f32.gmra.mxu0 %v217
      %v454 = vpop.f32.mrf.mxu0
      %v455 = vadd.f32 0.0, %v454
      %456 = vdwg.mxu0
      %457 = vmatpush.msra.mxu0 %v292
      %458 = vmatpush.msra.mxu0 %v290
      %459 = vmatpush.msra.mxu0 %v288
      %460 = vmatpush.msra.mxu0 %v286
      %461 = vmatpush.msra.mxu0 %v284
      %462 = vmatpush.msra.mxu0 %v282
      %463 = vmatpush.msra.mxu0 %v280
      %464 = vmatpush.msra.mxu0 %v278
      %465 = vmatpush.msra.mxu0 %v276
      %466 = vmatpush.msra.mxu0 %v274
      %467 = vmatpush.msra.mxu0 %v272
      %468 = vmatpush.msra.mxu0 %v270
      %469 = vmatpush.msra.mxu0 %v268
      %470 = vmatpush.msra.mxu0 %v266
      %471 = vmatpush.msra.mxu0 %v264
      %472 = vmatpush.msra.mxu0 %v262
      %473 = vmatmul.f32.gmra.mxu0 %v218
      %v474 = vpop.f32.mrf.mxu0
      %v475 = vadd.f32 %v455, %v474
      %476 = vdwg.mxu0
      %477 = vmatpush.msra.mxu0 %v324
      %478 = vmatpush.msra.mxu0 %v322
      %479 = vmatpush.msra.mxu0 %v320
      %480 = vmatpush.msra.mxu0 %v318
      %481 = vmatpush.msra.mxu0 %v316
      %482 = vmatpush.msra.mxu0 %v314
      %483 = vmatpush.msra.mxu0 %v312
      %484 = vmatpush.msra.mxu0 %v310
      %485 = vmatpush.msra.mxu0 %v308
      %486 = vmatpush.msra.mxu0 %v306
      %487 = vmatpush.msra.mxu0 %v304
      %488 = vmatpush.msra.mxu0 %v302
      %489 = vmatpush.msra.mxu0 %v300
      %490 = vmatpush.msra.mxu0 %v298
      %491 = vmatpush.msra.mxu0 %v296
      %492 = vmatpush.msra.mxu0 %v294
      %493 = vmatmul.f32.gmra.mxu0 %v225
      %v494 = vpop.f32.mrf.mxu0
      %v495 = vadd.f32 %v475, %v494
      %496 = vdwg.mxu0
      %497 = vmatpush.msra.mxu0 %v356
      %498 = vmatpush.msra.mxu0 %v354
      %499 = vmatpush.msra.mxu0 %v352
      %500 = vmatpush.msra.mxu0 %v350
      %501 = vmatpush.msra.mxu0 %v348
      %502 = vmatpush.msra.mxu0 %v346
      %503 = vmatpush.msra.mxu0 %v344
      %504 = vmatpush.msra.mxu0 %v342
      %505 = vmatpush.msra.mxu0 %v340
      %506 = vmatpush.msra.mxu0 %v338
      %507 = vmatpush.msra.mxu0 %v336
      %508 = vmatpush.msra.mxu0 %v334
      %509 = vmatpush.msra.mxu0 %v332
      %510 = vmatpush.msra.mxu0 %v330
      %511 = vmatpush.msra.mxu0 %v328
      %512 = vmatpush.msra.mxu0 %v326
      %513 = vmatmul.f32.gmra.mxu0 %v226
      %v514 = vpop.f32.mrf.mxu0
      %v515 = vadd.f32 %v495, %v514
      %516 = vdwg.mxu0
      %v517 = vsub.f32 0.0, %v435
      %v518 = vsub.f32 0.0, %v515
      %v519 = vmul.f32 %v517, 1.442695
      %v520 = vpow.pop %v519
      %v521 = vmul.f32 %v518, 1.442695
      %v522 = vpow.pop %v521
      %v523 = vadd.f32 %v520, 1.0
      %v524 = vadd.f32 %v522, 1.0
      %v525 = vrcp.pop %v523
      %v526 = vrcp.pop %v524
      %v529 = vrot.slane %v526, 6
      %vm530 = vcmask 1041408
      %v531 = vsel %vm530, %v525, %v529
      %533 = vst [vmem:[%s143] sm:$0xf] %v531
      %p534 = scmp.lt.s32.totalorder %s13, 1
      %s535 = scalar_select %p534, %s13, 1
      %s536 = smul.addr %s535, 2
      %s537 = smul.addr %s536, 2
      %s538 = scalar_lea.vmem %s2, %s537
      // Predicated region
      $region29: #{spatial_attention_pallas.1} parent=27 // pred_check
        %p539 = pneg %p78
      $region30: #{spatial_attention_pallas.1} parent=27 // pred_check_branch
        %541 = sbr.rel (%p539) target = $region32
      $region31: #{spatial_attention_pallas.1} parent=27 // pred_region
        _
      $region32: #{spatial_attention_pallas.1} parent=27 // pred_fallthru
        _
    $region28: #{spatial_attention_pallas.1} parent=5 // pred_fallthru
      _
    %p542 = scmp.le.s32.totalorder 2, %s8
    // Predicated region
    $region33: #{spatial_attention_pallas.1} parent=5 // pred_check
      %p543 = pneg %p542
    $region34: #{spatial_attention_pallas.1} parent=5 // pred_check_branch
      %545 = sbr.rel (%p543) target = $region36
    $region35: #{spatial_attention_pallas.1} parent=5 // pred_region
      %s546 = ssub.s32 %s8, 2
      // Predicated region
      $region37: #{spatial_attention_pallas.1} parent=35 // pred_check
        %p547 = pneg %p84
      $region38: #{spatial_attention_pallas.1} parent=35 // pred_check_branch
        %549 = sbr.rel (%p547) target = $region40
      $region39: #{spatial_attention_pallas.1} parent=35 // pred_region
        %p550 = scmp.lt.s32.totalorder %s14, 1
        %s551 = scalar_select %p550, %s14, 1
        %s552 = smul.addr %s551, 2
        %s553 = smul.addr %s552, 2
        %s554 = scalar_lea.vmem %s2, %s553
      $region40: #{spatial_attention_pallas.1} parent=35 // pred_fallthru
        _
    $region36: #{spatial_attention_pallas.1} parent=5 // pred_fallthru
      _
  $region6: #{spatial_attention_pallas.1} parent=0 // loop_footer
    %s12 = sadd.s32 1, %s8
  $region7: #{spatial_attention_pallas.1} parent=0 // loop_footer_branch
    %7 = sbr.rel target = $region3
  $region8: #{spatial_attention_pallas.1} parent=0 // loop_exit
    _

</llo_original>
